<compile_context>
chip_gen: v7x
topology: tpu7x:2x2x1
jax: 0.10.0
libtpu: 0.0.40
codegen_flags: <defaults>
</compile_context>

<pallas_src>
import jax
import jax.numpy as jnp
from jax.experimental import pallas as pl
from jax.experimental.pallas import tpu as pltpu


def regressor_kernel(x_ref, w1_ref, b12_ref, w2_ref, w3_ref, b3_ref, o_ref):
    x = x_ref[...]                                    # (TM, D) f32
    xb = x.astype(jnp.bfloat16)

    # linear1 + relu  (bf16 MXU, f32 accumulate)
    h = jnp.dot(xb, w1_ref[...], preferred_element_type=jnp.float32)
    h = jnp.maximum(h + b12_ref[0:1, :], 0.0)

    # linear2 + relu  (mask[0] already folded into w2)
    h = jnp.dot(h.astype(jnp.bfloat16), w2_ref[...], preferred_element_type=jnp.float32)
    h = jnp.maximum(h + b12_ref[1:2, :], 0.0)

    # linear3 + bias + residual  (mask[1] already folded into w3)
    out = jnp.dot(h.astype(jnp.bfloat16), w3_ref[...], preferred_element_type=jnp.float32)
    o_ref[...] = (out + b3_ref[...] + x).astype(o_ref.dtype)


def regressor_control_f(x, params, mask, *, tm=None):
    """x: (B, D) f32, mask: (2, 64) f32, params as (in, out)-layout weights. Returns (B, D) f32."""
    B, D = x.shape
    w1, b1, w2, b2, w3, b3 = params
    H = w1.shape[1]  # 64
    assert w3.shape[1] == D, "residual add requires output_dim == input_dim"

    # Fold masks into the downstream weights (exact: (h*m) @ W == h @ (diag(m) @ W)).
    w2m = mask[0][:, None] * w2
    w3m = mask[1][:, None] * w3

    # Resident weight buffers in bf16; biases stay f32 (tiny).
    w1_b = w1.astype(jnp.bfloat16)
    w2_b = w2m.astype(jnp.bfloat16)
    w3_b = w3m.astype(jnp.bfloat16)
    b12 = jnp.concatenate([b1, b2], axis=0).astype(jnp.float32)   # (2, H)
    b3f = b3.astype(jnp.float32)                                  # (1, D)

    # Large batch tile (multiple of 8 sublanes), remainder handled by padding.
    # VMEM footprint at tm=8192, D=32 f32: ~1 MiB/tile, double-buffered in+out ~4 MiB.
    if tm is None:
        tm = min(((B + 7) // 8) * 8, 8192)
    grid_b = pl.cdiv(B, tm)
    B_pad = grid_b * tm
    x_p = x if B_pad == B else jnp.pad(x, ((0, B_pad - B), (0, 0)))

    rep = lambda shape: pl.BlockSpec(shape, lambda i: (0, 0))  # VMEM-resident across steps

    out = pl.pallas_call(
        regressor_kernel,
        out_shape=jax.ShapeDtypeStruct((B_pad, D), jnp.float32),
        grid_spec=pltpu.PrefetchScalarGridSpec(
            num_scalar_prefetch=0,
            grid=(grid_b,),
            in_specs=[
                pl.BlockSpec((tm, D), lambda i: (i, 0)),   # x tile (streamed)
                rep((D, H)),                               # w1 (bf16)
                rep((2, H)),                               # [b1; b2] (f32)
                rep((H, H)),                               # w2 * mask[0] (bf16)
                rep((H, D)),                               # w3 * mask[1] (bf16)
                rep((1, D)),                               # b3 (f32)
            ],
            out_specs=pl.BlockSpec((tm, D), lambda i: (i, 0)),
        ),
        compiler_params=pltpu.CompilerParams(dimension_semantics=("parallel",)),
    )(x_p, w1_b, b12, w2_b, w3_b, b3f)

    return out[:B] if B_pad != B else out


def init_params(key, input_dim, output_dim, hidden=64):
    """Deterministic init matching nn.Linear shapes; weights stored as (in, out)."""
    ks = jax.random.split(key, 6)

    def linear(kw, kb, fan_in, fan_out):
        bound = 1.0 / jnp.sqrt(fan_in)
        w = jax.random.uniform(kw, (fan_in, fan_out), jnp.float32, -bound, bound)
        b = jax.random.uniform(kb, (1, fan_out), jnp.float32, -bound, bound)
        return w, b

    w1, b1 = linear(ks[0], ks[1], input_dim, hidden)
    w2, b2 = linear(ks[2], ks[3], hidden, hidden)
    w3, b3 = linear(ks[4], ks[5], hidden, output_dim)
    return (w1, b1, w2, b2, w3, b3)


def reference(x, params, mask):
    w1, b1, w2, b2, w3, b3 = params
    y = jax.nn.relu(x @ w1 + b1)
    y = jax.nn.relu((y * mask[0:1]) @ w2 + b2)
    return (y * mask[1:2]) @ w3 + b3 + x


if __name__ == "__main__":
    key = jax.random.PRNGKey(0)
    k_x, k_x2, k_m, k_p = jax.random.split(key, 4)

    B, D, H = 8, 32, 64                       # input_dim = output_dim = 32, hidden fixed at 64
    x = jax.random.normal(k_x, (B, D), jnp.float32)
    mask = (jax.random.uniform(k_m, (2, H)) > 0.3).astype(jnp.float32)
    params = init_params(k_p, D, D, H)

    # bf16 MXU matmuls with f32 accumulation -> loosen tolerance vs. f32 reference.
    TOL = dict(atol=3e-2, rtol=3e-2)

    out = jax.block_until_ready(regressor_control_f(x, params, mask))
    ref = reference(x, params, mask)
    assert out.shape == (B, D)
    assert jnp.allclose(out, ref, **TOL)

    # Second check: non-divisible batch with an explicit small tile -> exercises
    # the padding path and a multi-step grid.
    B2 = 12
    x2 = jax.random.normal(k_x2, (B2, D), jnp.float32)
    out2 = jax.block_until_ready(regressor_control_f(x2, params, mask, tm=8))
    ref2 = reference(x2, params, mask)
    assert out2.shape == (B2, D)
    assert jnp.allclose(out2, ref2, **TOL)

    print("KERNEL_OK")
</pallas_src>

<mosaic_0001>
module attributes {stable_mosaic.version = 11 : i64} {
  func.func @regressor_kernel(%arg0: i32, %arg1: memref<8x32xf32, #tpu.memory_space<vmem>>, %arg2: memref<32x64xbf16, #tpu.memory_space<vmem>>, %arg3: memref<2x64xf32, #tpu.memory_space<vmem>>, %arg4: memref<64x64xbf16, #tpu.memory_space<vmem>>, %arg5: memref<64x32xbf16, #tpu.memory_space<vmem>>, %arg6: memref<1x32xf32, #tpu.memory_space<vmem>>, %arg7: memref<8x32xf32, #tpu.memory_space<vmem>>) attributes {dimension_semantics = [#tpu.dimension_semantics<parallel>], iteration_bounds = array<i64: 1>, scalar_prefetch = 0 : i64, scratch_operands = 0 : i64, tpu.core_type = #tpu.core_type<tc>, window_params = [{transform_indices = @transform_0, window_bounds = array<i64: 8, 32>}, {pipeline_mode = #tpu.pipeline_mode<synchronous>, transform_indices = @transform_1, window_bounds = array<i64: 32, 64>}, {pipeline_mode = #tpu.pipeline_mode<synchronous>, transform_indices = @transform_2, window_bounds = array<i64: 2, 64>}, {pipeline_mode = #tpu.pipeline_mode<synchronous>, transform_indices = @transform_3, window_bounds = array<i64: 64, 64>}, {pipeline_mode = #tpu.pipeline_mode<synchronous>, transform_indices = @transform_4, window_bounds = array<i64: 64, 32>}, {pipeline_mode = #tpu.pipeline_mode<synchronous>, transform_indices = @transform_5, window_bounds = array<i64: 1, 32>}, {transform_indices = @transform_6, window_bounds = array<i64: 8, 32>}]} {
    %c0 = arith.constant 0 : index
    %c0_0 = arith.constant 0 : index
    %0 = vector.load %arg1[%c0, %c0_0] : memref<8x32xf32, #tpu.memory_space<vmem>>, vector<8x32xf32>
    %1 = arith.truncf %0 : vector<8x32xf32> to vector<8x32xbf16>
    %c0_1 = arith.constant 0 : index
    %c0_2 = arith.constant 0 : index
    %2 = vector.load %arg2[%c0_1, %c0_2] : memref<32x64xbf16, #tpu.memory_space<vmem>>, vector<32x64xbf16>
    %cst = arith.constant dense<0.000000e+00> : vector<8x64xf32>
    %3 = tpu.matmul %1, %2, %cst {dimension_numbers = #tpu.dot_dimension_numbers<[1], [0], [0], [1], [0, 0, 1, 1], [], []>} : vector<8x32xbf16>, vector<32x64xbf16>, vector<8x64xf32> -> vector<8x64xf32>
    %c0_3 = arith.constant 0 : index
    %c0_4 = arith.constant 0 : index
    %4 = vector.load %arg3[%c0_3, %c0_4] : memref<2x64xf32, #tpu.memory_space<vmem>>, vector<1x64xf32>
    %5 = vector.broadcast %4 : vector<1x64xf32> to vector<8x64xf32>
    %6 = arith.addf %3, %5 : vector<8x64xf32>
    %cst_5 = arith.constant 0.000000e+00 : f32
    %7 = vector.broadcast %cst_5 : f32 to vector<8x64xf32>
    %8 = arith.maximumf %6, %7 : vector<8x64xf32>
    %9 = arith.truncf %8 : vector<8x64xf32> to vector<8x64xbf16>
    %c0_6 = arith.constant 0 : index
    %c0_7 = arith.constant 0 : index
    %10 = vector.load %arg4[%c0_6, %c0_7] : memref<64x64xbf16, #tpu.memory_space<vmem>>, vector<64x64xbf16>
    %cst_8 = arith.constant dense<0.000000e+00> : vector<8x64xf32>
    %11 = tpu.matmul %9, %10, %cst_8 {dimension_numbers = #tpu.dot_dimension_numbers<[1], [0], [0], [1], [0, 0, 1, 1], [], []>} : vector<8x64xbf16>, vector<64x64xbf16>, vector<8x64xf32> -> vector<8x64xf32>
    %c1 = arith.constant 1 : index
    %c0_9 = arith.constant 0 : index
    %12 = vector.load %arg3[%c1, %c0_9] : memref<2x64xf32, #tpu.memory_space<vmem>>, vector<1x64xf32>
    %13 = vector.broadcast %12 : vector<1x64xf32> to vector<8x64xf32>
    %14 = arith.addf %11, %13 : vector<8x64xf32>
    %cst_10 = arith.constant 0.000000e+00 : f32
    %15 = vector.broadcast %cst_10 : f32 to vector<8x64xf32>
    %16 = arith.maximumf %14, %15 : vector<8x64xf32>
    %17 = arith.truncf %16 : vector<8x64xf32> to vector<8x64xbf16>
    %c0_11 = arith.constant 0 : index
    %c0_12 = arith.constant 0 : index
    %18 = vector.load %arg5[%c0_11, %c0_12] : memref<64x32xbf16, #tpu.memory_space<vmem>>, vector<64x32xbf16>
    %cst_13 = arith.constant dense<0.000000e+00> : vector<8x32xf32>
    %19 = tpu.matmul %17, %18, %cst_13 {dimension_numbers = #tpu.dot_dimension_numbers<[1], [0], [0], [1], [0, 0, 1, 1], [], []>} : vector<8x64xbf16>, vector<64x32xbf16>, vector<8x32xf32> -> vector<8x32xf32>
    %c0_14 = arith.constant 0 : index
    %c0_15 = arith.constant 0 : index
    %20 = vector.load %arg6[%c0_14, %c0_15] : memref<1x32xf32, #tpu.memory_space<vmem>>, vector<1x32xf32>
    %21 = vector.broadcast %20 : vector<1x32xf32> to vector<8x32xf32>
    %22 = arith.addf %19, %21 : vector<8x32xf32>
    %23 = arith.addf %22, %0 : vector<8x32xf32>
    %c0_16 = arith.constant 0 : index
    %c0_17 = arith.constant 0 : index
    %24 = vector.load %arg7[%c0_16, %c0_17] : memref<8x32xf32, #tpu.memory_space<vmem>>, vector<8x32xf32>
    tpu.vector_store %arg7[%c0_16, %c0_17], %23 {strides = array<i32>} : memref<8x32xf32, #tpu.memory_space<vmem>>, vector<8x32xf32>,
    return
  }
  func.func @transform_0(%arg0: i32) -> (i32, i32) {
    %c0_i32 = arith.constant 0 : i32
    %c0_i32_0 = arith.constant 0 : i32
    return %arg0, %c0_i32 : i32, i32
  }
  func.func @transform_1(%arg0: i32) -> (i32, i32) {
    %c0_i32 = arith.constant 0 : i32
    %c0_i32_0 = arith.constant 0 : i32
    %c0_i32_1 = arith.constant 0 : i32
    return %c0_i32, %c0_i32_0 : i32, i32
  }
  func.func @transform_2(%arg0: i32) -> (i32, i32) {
    %c0_i32 = arith.constant 0 : i32
    %c0_i32_0 = arith.constant 0 : i32
    %c0_i32_1 = arith.constant 0 : i32
    return %c0_i32, %c0_i32_0 : i32, i32
  }
  func.func @transform_3(%arg0: i32) -> (i32, i32) {
    %c0_i32 = arith.constant 0 : i32
    %c0_i32_0 = arith.constant 0 : i32
    %c0_i32_1 = arith.constant 0 : i32
    return %c0_i32, %c0_i32_0 : i32, i32
  }
  func.func @transform_4(%arg0: i32) -> (i32, i32) {
    %c0_i32 = arith.constant 0 : i32
    %c0_i32_0 = arith.constant 0 : i32
    %c0_i32_1 = arith.constant 0 : i32
    return %c0_i32, %c0_i32_0 : i32, i32
  }
  func.func @transform_5(%arg0: i32) -> (i32, i32) {
    %c0_i32 = arith.constant 0 : i32
    %c0_i32_0 = arith.constant 0 : i32
    %c0_i32_1 = arith.constant 0 : i32
    return %c0_i32, %c0_i32_0 : i32, i32
  }
  func.func @transform_6(%arg0: i32) -> (i32, i32) {
    %c0_i32 = arith.constant 0 : i32
    %c0_i32_0 = arith.constant 0 : i32
    return %arg0, %c0_i32 : i32, i32
  }
}

</mosaic_0001>

<llo_original>
// kernel: tpu_custom_call.1
$region0: #{tpu_custom_call.1}
  #allocation0 [shape = 'u32[]', space=smem, size = 0x4, offset = 0x4, fixed_abs, tag = 'smem constant byte address 0x4 - core index']
  #allocation1 [shape = 'u32[144,128]{1,0:T(1,128)}', space=vmem, size = 0x12000, scoped, tag = 'internal scratch']
  %s0 = inlined_call_operand.vmem [shape: f32[8,32], index: 0, kind: input, shape index: {}]
  %s1 = inlined_call_operand.vmem [shape: bf16[32,64], index: 1, kind: input, shape index: {}]
  %s2 = inlined_call_operand.vmem [shape: f32[2,64], index: 2, kind: input, shape index: {}]
  %s3 = inlined_call_operand.vmem [shape: bf16[64,64], index: 3, kind: input, shape index: {}]
  %s4 = inlined_call_operand.vmem [shape: bf16[64,32], index: 4, kind: input, shape index: {}]
  %s5 = inlined_call_operand.vmem [shape: f32[1,32], index: 5, kind: input, shape index: {}]
  %s6 = inlined_call_operand.hbm [shape: f32[8,32], index: 6, kind: output, shape index: {}]
  %s7 = sld [smem:[#allocation0]]
  $region34: #{tpu_custom_call.1} parent=0
    _
  %s9 = ssub.s32 1, %s7
  %s10 = scalar_select 0, %s9, %s7
  $region1: #{tpu_custom_call.1} parent=0
    #allocation2 [shape = 'u8[4096]{0}', space=vmem, size = 0x1000, scoped, tag = 'output window, operand 0, single buffered']
    #allocation3 [shape = 's32[1]{0}', space=sflag, size = 0x4, scoped, tag = 'scoped memory for tpu_custom_call.1']
    %11 = vsyncpa [#allocation3], 0
    // Predicated region
    $region2: #{tpu_custom_call.1} parent=1 // pred_check
      _
    $region3: #{tpu_custom_call.1} parent=1 // pred_check_branch
      %13 = sbr.rel (0) target = $region5
    $region4: #{tpu_custom_call.1} parent=1 // pred_region
      _
    $region5: #{tpu_custom_call.1} parent=1 // pred_fallthru
      _
    // Predicated region
    $region6: #{tpu_custom_call.1} parent=1 // pred_check
      _
    $region7: #{tpu_custom_call.1} parent=1 // pred_check_branch
      %15 = sbr.rel (0) target = $region9
    $region8: #{tpu_custom_call.1} parent=1 // pred_region
      _
    $region9: #{tpu_custom_call.1} parent=1 // pred_fallthru
      _
    // Predicated region
    $region10: #{tpu_custom_call.1} parent=1 // pred_check
      _
    $region11: #{tpu_custom_call.1} parent=1 // pred_check_branch
      %17 = sbr.rel (0) target = $region13
    $region12: #{tpu_custom_call.1} parent=1 // pred_region
      _
    $region13: #{tpu_custom_call.1} parent=1 // pred_fallthru
      _
    // Predicated region
    $region14: #{tpu_custom_call.1} parent=1 // pred_check
      _
    $region15: #{tpu_custom_call.1} parent=1 // pred_check_branch
      %19 = sbr.rel (0) target = $region17
    $region16: #{tpu_custom_call.1} parent=1 // pred_region
      _
    $region17: #{tpu_custom_call.1} parent=1 // pred_fallthru
      _
    // Predicated region
    $region18: #{tpu_custom_call.1} parent=1 // pred_check
      _
    $region19: #{tpu_custom_call.1} parent=1 // pred_check_branch
      %21 = sbr.rel (0) target = $region21
    $region20: #{tpu_custom_call.1} parent=1 // pred_region
      _
    $region21: #{tpu_custom_call.1} parent=1 // pred_fallthru
      _
    // Predicated region
    $region22: #{tpu_custom_call.1} parent=1 // pred_check
      _
    $region23: #{tpu_custom_call.1} parent=1 // pred_check_branch
      %23 = sbr.rel (0) target = $region25
    $region24: #{tpu_custom_call.1} parent=1 // pred_region
      _
    $region25: #{tpu_custom_call.1} parent=1 // pred_fallthru
      _
    %v25 = vld [vmem:[%s0] sm:$0xff]
    %v26 = vpack.c.bf16 %v25, %v25
    %v27 = vld [vmem:[%s1] sm:$0xf]
    %v28 = vld [vmem:[%s1 + $0x4] sm:$0xf]
    %v29 = vld [vmem:[%s1 + $0x8] sm:$0xf]
    %v30 = vld [vmem:[%s1 + $0xc] sm:$0xf]
    %v31 = vld [vmem:[%s2] sm:$0x1]
    %v32 = vlaneseq
    %v33 = vshrl.u32 %v32, 7
    %v34 = vsub.s32 0, %v33
    %v35 = vrot.slane %v31, %v34
    %v40 = vunpack.c.l.b16 %v27
    %v41 = vunpack.c.l.b16 %v28
    %v42 = vunpack.c.l.b16 %v29
    %v43 = vunpack.c.l.b16 %v30
    %v44 = vpack.c.b16 %v41, %v40
    %v45 = vpack.c.b16 %v43, %v42
    %vm48 = vcmask 261120
    %v50 = vsel %vm48, %v26, 0
    %52 = vmatprep.subr.bf16.mxu0 0
    %53 = vmatpush1.bf16.msra.mxu0 %v44
    %54 = vmatprep.subr.bf16.mxu0 0
    %55 = vmatpush1.bf16.msra.mxu0 %v45
    %56 = vmatprep.subr.bf16.mxu0 0
    %57 = vmatpush1.bf16.msra.mxu0 0
    %58 = vmatprep.subr.bf16.mxu0 0
    %59 = vmatpush1.bf16.msra.mxu0 0
    %60 = vmatprep.subr.bf16.mxu0 0
    %61 = vmatpush1.bf16.msra.mxu0 0
    %62 = vmatprep.subr.bf16.mxu0 0
    %63 = vmatpush1.bf16.msra.mxu0 0
    %64 = vmatprep.subr.bf16.mxu0 0
    %65 = vmatpush1.bf16.msra.mxu0 0
    %66 = vmatprep.subr.bf16.mxu0 0
    %67 = vmatpush1.bf16.msra.mxu0 0
    %68 = vmatprep.subr.bf16.mxu0 0
    %69 = vmatpush1.bf16.msra.mxu0 0
    %70 = vmatprep.subr.bf16.mxu0 0
    %71 = vmatpush1.bf16.msra.mxu0 0
    %72 = vmatprep.subr.bf16.mxu0 0
    %73 = vmatpush1.bf16.msra.mxu0 0
    %74 = vmatprep.subr.bf16.mxu0 0
    %75 = vmatpush1.bf16.msra.mxu0 0
    %76 = vmatprep.subr.bf16.mxu0 0
    %77 = vmatpush1.bf16.msra.mxu0 0
    %78 = vmatprep.subr.bf16.mxu0 0
    %79 = vmatpush1.bf16.msra.mxu0 0
    %80 = vmatprep.subr.bf16.mxu0 0
    %81 = vmatpush1.bf16.msra.mxu0 0
    %82 = vmatprep.subr.bf16.mxu0 0
    %83 = vmatpush1.bf16.msra.mxu0 0
    %84 = vmatprep.mubr.bf16.mxu0 0
    %85 = vmatmul.mubr.bf16.gmra.mrb[0].mxu0 %v50
    %v86 = vpop.f32.mrb[0].mxu0
    %v87 = vadd.f32 %v35, %v86
    %v88 = vpop.f32.mrb[0].mxu0
    %v89 = vpop.f32.mrb[0].mxu0
    %v90 = vpop.f32.mrb[0].mxu0
    %91 = vdwg.mxu0
    %v92 = vmax.f32 %v87, 0.0
    %v93 = vpack.c.bf16 %v92, %v92
    %v94 = vld [vmem:[%s3] sm:$0xf]
    %v95 = vld [vmem:[%s3 + $0x4] sm:$0xf]
    %v96 = vld [vmem:[%s3 + $0x8] sm:$0xf]
    %v97 = vld [vmem:[%s3 + $0xc] sm:$0xf]
    %v98 = vld [vmem:[%s3 + $0x10] sm:$0xf]
    %v99 = vld [vmem:[%s3 + $0x14] sm:$0xf]
    %v100 = vld [vmem:[%s3 + $0x18] sm:$0xf]
    %v101 = vld [vmem:[%s3 + $0x1c] sm:$0xf]
    %v102 = vld [vmem:[%s2 + $0x1] sm:$0x1]
    %v103 = vlaneseq
    %v104 = vshrl.u32 %v103, 7
    %v105 = vsub.s32 0, %v104
    %v106 = vrot.slane %v102, %v105
    %v115 = vunpack.c.l.b16 %v94
    %v116 = vunpack.c.l.b16 %v95
    %v117 = vunpack.c.l.b16 %v96
    %v118 = vunpack.c.l.b16 %v97
    %v119 = vunpack.c.l.b16 %v98
    %v120 = vunpack.c.l.b16 %v99
    %v121 = vunpack.c.l.b16 %v100
    %v122 = vunpack.c.l.b16 %v101
    %v123 = vpack.c.b16 %v116, %v115
    %v124 = vpack.c.b16 %v118, %v117
    %v125 = vpack.c.b16 %v120, %v119
    %v126 = vpack.c.b16 %v122, %v121
    %vm131 = vcmask 523264
    %v133 = vsel %vm131, %v93, 0
    %135 = vmatprep.subr.bf16.mxu0 0
    %136 = vmatpush1.bf16.msra.mxu0 %v123
    %137 = vmatprep.subr.bf16.mxu0 0
    %138 = vmatpush1.bf16.msra.mxu0 %v124
    %139 = vmatprep.subr.bf16.mxu0 0
    %140 = vmatpush1.bf16.msra.mxu0 %v125
    %141 = vmatprep.subr.bf16.mxu0 0
    %142 = vmatpush1.bf16.msra.mxu0 %v126
    %143 = vmatprep.subr.bf16.mxu0 0
    %144 = vmatpush1.bf16.msra.mxu0 0
    %145 = vmatprep.subr.bf16.mxu0 0
    %146 = vmatpush1.bf16.msra.mxu0 0
    %147 = vmatprep.subr.bf16.mxu0 0
    %148 = vmatpush1.bf16.msra.mxu0 0
    %149 = vmatprep.subr.bf16.mxu0 0
    %150 = vmatpush1.bf16.msra.mxu0 0
    %151 = vmatprep.subr.bf16.mxu0 0
    %152 = vmatpush1.bf16.msra.mxu0 0
    %153 = vmatprep.subr.bf16.mxu0 0
    %154 = vmatpush1.bf16.msra.mxu0 0
    %155 = vmatprep.subr.bf16.mxu0 0
    %156 = vmatpush1.bf16.msra.mxu0 0
    %157 = vmatprep.subr.bf16.mxu0 0
    %158 = vmatpush1.bf16.msra.mxu0 0
    %159 = vmatprep.subr.bf16.mxu0 0
    %160 = vmatpush1.bf16.msra.mxu0 0
    %161 = vmatprep.subr.bf16.mxu0 0
    %162 = vmatpush1.bf16.msra.mxu0 0
    %163 = vmatprep.subr.bf16.mxu0 0
    %164 = vmatpush1.bf16.msra.mxu0 0
    %165 = vmatprep.subr.bf16.mxu0 0
    %166 = vmatpush1.bf16.msra.mxu0 0
    %167 = vmatprep.mubr.bf16.mxu0 0
    %168 = vmatmul.mubr.bf16.gmra.mrb[0].mxu0 %v133
    %v169 = vpop.f32.mrb[0].mxu0
    %v170 = vadd.f32 %v106, %v169
    %v171 = vpop.f32.mrb[0].mxu0
    %v172 = vpop.f32.mrb[0].mxu0
    %v173 = vpop.f32.mrb[0].mxu0
    %174 = vdwg.mxu0
    %v175 = vmax.f32 %v170, 0.0
    %v176 = vpack.c.bf16 %v175, %v175
    %v177 = vld [vmem:[%s4] sm:$0xf]
    %v178 = vld [vmem:[%s4 + $0x4] sm:$0xf]
    %v179 = vld [vmem:[%s4 + $0x8] sm:$0xf]
    %v180 = vld [vmem:[%s4 + $0xc] sm:$0xf]
    %v181 = vld [vmem:[%s4 + $0x10] sm:$0xf]
    %v182 = vld [vmem:[%s4 + $0x14] sm:$0xf]
    %v183 = vld [vmem:[%s4 + $0x18] sm:$0xf]
    %v184 = vld [vmem:[%s4 + $0x1c] sm:$0xf]
    %v185 = vld [vmem:[%s5] sm:$0x1]
    %v187 = vlaneseq
    %v188 = vshrl.u32 %v187, 7
    %v189 = vsub.s32 0, %v188
    %v190 = vrot.slane %v185, %v189
    %v200 = vunpack.c.l.b16 %v177
    %v201 = vunpack.c.l.b16 %v178
    %v202 = vunpack.c.l.b16 %v179
    %v203 = vunpack.c.l.b16 %v180
    %v204 = vunpack.c.l.b16 %v181
    %v205 = vunpack.c.l.b16 %v182
    %v206 = vunpack.c.l.b16 %v183
    %v207 = vunpack.c.l.b16 %v184
    %v208 = vpack.c.b16 %v201, %v200
    %v209 = vpack.c.b16 %v203, %v202
    %v210 = vpack.c.b16 %v205, %v204
    %v211 = vpack.c.b16 %v207, %v206
    %v217 = vsel %vm131, %v176, 0
    %219 = vmatprep.subr.bf16.mxu0 0
    %220 = vmatpush1.bf16.msra.mxu0 %v208
    %221 = vmatprep.subr.bf16.mxu0 0
    %222 = vmatpush1.bf16.msra.mxu0 %v209
    %223 = vmatprep.subr.bf16.mxu0 0
    %224 = vmatpush1.bf16.msra.mxu0 %v210
    %225 = vmatprep.subr.bf16.mxu0 0
    %226 = vmatpush1.bf16.msra.mxu0 %v211
    %227 = vmatprep.subr.bf16.mxu0 0
    %228 = vmatpush1.bf16.msra.mxu0 0
    %229 = vmatprep.subr.bf16.mxu0 0
    %230 = vmatpush1.bf16.msra.mxu0 0
    %231 = vmatprep.subr.bf16.mxu0 0
    %232 = vmatpush1.bf16.msra.mxu0 0
    %233 = vmatprep.subr.bf16.mxu0 0
    %234 = vmatpush1.bf16.msra.mxu0 0
    %235 = vmatprep.subr.bf16.mxu0 0
    %236 = vmatpush1.bf16.msra.mxu0 0
    %237 = vmatprep.subr.bf16.mxu0 0
    %238 = vmatpush1.bf16.msra.mxu0 0
    %239 = vmatprep.subr.bf16.mxu0 0
    %240 = vmatpush1.bf16.msra.mxu0 0
    %241 = vmatprep.subr.bf16.mxu0 0
    %242 = vmatpush1.bf16.msra.mxu0 0
    %243 = vmatprep.subr.bf16.mxu0 0
    %244 = vmatpush1.bf16.msra.mxu0 0
    %245 = vmatprep.subr.bf16.mxu0 0
    %246 = vmatpush1.bf16.msra.mxu0 0
    %247 = vmatprep.subr.bf16.mxu0 0
    %248 = vmatpush1.bf16.msra.mxu0 0
    %249 = vmatprep.subr.bf16.mxu0 0
    %250 = vmatpush1.bf16.msra.mxu0 0
    %251 = vmatprep.mubr.bf16.mxu0 0
    %252 = vmatmul.mubr.bf16.gmra.mrb[0].mxu0 %v217
    %v253 = vpop.f32.mrb[0].mxu0
    %v254 = vadd.f32 %v190, %v253
    %v255 = vpop.f32.mrb[0].mxu0
    %v256 = vpop.f32.mrb[0].mxu0
    %v257 = vpop.f32.mrb[0].mxu0
    %258 = vdwg.mxu0
    %v259 = vadd.f32 %v254, %v25
    %260 = vst.msk [vmem:[#allocation2] sm:$0xff] %vm48, %v259
    // Predicated region
    $region26: #{tpu_custom_call.1} parent=1 // pred_check
      _
    $region27: #{tpu_custom_call.1} parent=1 // pred_check_branch
      %262 = sbr.rel (0) target = $region29
    $region28: #{tpu_custom_call.1} parent=1 // pred_region
      %s264 = ssub.s32 128, 128
      %265 = vsyncadd [#allocation3], %s264
      %s267 = sshll.u32 [#allocation2], 4
      %s268 = int_to_ptr.vmem [resolvable:$true] %s267
      %270 = dma.vmem_to_hbm [thread:$0]  %s268, 128, %s6, [#allocation3]
    $region29: #{tpu_custom_call.1} parent=1 // pred_fallthru
      _
    // Predicated region
    $region30: #{tpu_custom_call.1} parent=1 // pred_check
      _
    $region31: #{tpu_custom_call.1} parent=1 // pred_check_branch
      %272 = sbr.rel (0) target = $region33
    $region32: #{tpu_custom_call.1} parent=1 // pred_region
      %273 = dma.done [#allocation3], 128
    $region33: #{tpu_custom_call.1} parent=1 // pred_fallthru
      _
    %274 = vsyncpa [#allocation3], 1

</llo_original>
